<compile_context>
chip_gen: v5e
topology: v5e:2x2
jax: 0.10.0
libtpu: 0.0.40
codegen_flags: <defaults>
</compile_context>

<pallas_src>
import math

import jax
import jax.numpy as jnp
from jax.experimental import pallas as pl
from jax.experimental.pallas import tpu as pltpu


def _round_up(x, m):
    return -(-x // m) * m


def _bilinear_kernel(xi_ref, xj_ref, w_ref, segt_ref, o_ref):
    """xi/xj: (tm, P)   w: (P, P)   segt: (pack, P)   o: (pack, tm)."""
    # proj[n, o] = sum_h xi[n, h] * w[o, h]   (== xi @ W_eff.T; no transpose is
    # materialized; W_eff is block-diagonal when rows are lane-packed).
    proj = jax.lax.dot_general(
        xi_ref[...], w_ref[...],
        dimension_numbers=(((1,), (1,)), ((), ())),
        preferred_element_type=jnp.float32,
    )
    prod = proj * xj_ref[...].astype(jnp.float32)
    # Lane-dense output: o[g, n] = sum_h segt[g, h] * prod[n, h]  (the same
    # "A @ B.T" contraction pattern as q @ k.T in attention).  The long row
    # axis (tm) lands on the 128-lane axis of the output block -> unmasked
    # stores and a tiny VMEM out buffer, per the perf review.
    o_ref[...] = jax.lax.dot_general(
        segt_ref[...], prod,
        dimension_numbers=(((1,), (1,)), ((), ())),
        preferred_element_type=jnp.float32,
    ).astype(o_ref.dtype)


def bilinear_predictor(x_i, x_j, weight, *, tm=None, compute_dtype=None,
                       vmem_budget_bytes=20 * 1024 * 1024):
    """x_i, x_j: (N, H); weight: (H, H) torch.nn.Linear weight (bias=False).

    Returns (N,) == sum((x_i @ weight.T) * x_j, axis=-1).

    compute_dtype: optionally cast inputs/weight (e.g. jnp.bfloat16 on v5e to
    halve HBM traffic on a purely HBM-bound kernel).  For the full benefit the
    caller should pass bf16 arrays directly (an in-wrapper cast still reads f32).
    """
    N, H = x_i.shape
    assert x_j.shape == (N, H) and weight.shape == (H, H)

    if compute_dtype is not None:
        x_i = x_i.astype(compute_dtype)
        x_j = x_j.astype(compute_dtype)
    weight = weight.astype(x_i.dtype)
    dtype = x_i.dtype
    out_dtype = dtype
    if N == 0:
        return jnp.zeros((0,), out_dtype)

    in_itemsize = jnp.dtype(dtype).itemsize
    out_itemsize = jnp.dtype(out_dtype).itemsize

    # ---- lane packing: `pack` logical rows per 128-lane register row.
    # pack_base = 128 // gcd(H, 128) is the smallest pack making P a multiple
    # of 128 (H = 32, 48, 64, 96, ... all land lane-dense).  Additionally
    # require pack | N so the reshape below is a free bitcast and no host-side
    # pad/slice copy is ever made; if N is odd we degrade gracefully
    # (worst case pack = 1: lane-sparse but still copy-free).
    pack_base = 128 // math.gcd(H, 128)
    if pack_base * H > 512:            # keep P modest
        pack_base = 1
    pack = math.gcd(pack_base, N)
    P = pack * H
    n_pack = N // pack

    # Effective weight: block-diagonal replication of W for packed rows (the
    # kernel contracts dim 1, so no transpose is materialized anywhere).
    w_eff = weight if pack == 1 else jnp.kron(jnp.eye(pack, dtype=dtype), weight)
    # Transposed segment-sum matrix: segt[g, p] = 1 iff lane p belongs to slot g.
    segt = (jnp.arange(P)[None, :] // H ==
            jnp.arange(pack)[:, None]).astype(jnp.float32)

    # ---- VMEM accounting with real (sublane / lane padded) buffer sizes.
    sub_in = {4: 8, 2: 16, 1: 32}.get(in_itemsize, 8)
    sub_out = {4: 8, 2: 16, 1: 32}.get(out_itemsize, 8)
    P_lanes = _round_up(P, 128)
    in_row_bytes = P_lanes * in_itemsize                    # per packed row / buffer
    out_row_bytes = _round_up(pack, sub_out) * out_itemsize
    w_bytes = _round_up(P, sub_in) * P_lanes * in_itemsize  # per buffer
    seg_bytes = _round_up(pack, 8) * P_lanes * 4

    # Weight / segment matrix use a constant index_map (DMA'd once).  When the
    # weight is large, single-buffer it to halve its footprint.
    w_single = w_bytes > (2 << 20)

    def _const_spec(shape, single):
        if single:
            try:
                return pl.BlockSpec(shape, lambda i: (0, 0),
                                    pipeline_mode=pl.Buffered(1))
            except Exception:           # older jax without pipeline_mode
                pass
        return pl.BlockSpec(shape, lambda i: (0, 0))

    n_w_buf = 1 if w_single else 2
    fixed = n_w_buf * w_bytes + 2 * seg_bytes
    per_row = 2 * 2 * in_row_bytes + 2 * out_row_bytes      # 2 inputs x 2 bufs + out

    # ---- row-tile size: biggest tile fitting the budget, capped so large N
    # still gives a multi-step double-buffered pipeline (and a "parallel" axis
    # v7x can shard over 2 TensorCores).  On v7x, raise the cap when there
    # would still be >= 4 grid steps.
    if tm is None:
        cap = 4096
        try:
            if "v7" in jax.devices()[0].device_kind.lower() and \
                    -(-n_pack // 8192) >= 4:
                cap = 8192
        except Exception:
            pass
        tm = max(128, (vmem_budget_bytes - fixed) // max(per_row, 1))
        tm = min(int(tm), cap)
    if tm >= n_pack:
        tm = n_pack                       # single full-dim block, no alignment needed
    else:
        tm = max(128, (int(tm) // 128) * 128)   # lane/sublane aligned for any dtype

    # Ragged last block: boundary garbage stays in its own (discarded) rows.
    num_blocks = pl.cdiv(n_pack, tm)

    est = fixed + tm * per_row
    vmem_limit = int(min(48 << 20, max(32 << 20, 2 * est + (8 << 20))))

    # Free row-major bitcast (pack | N by construction): no pad, no copy.
    xi_p = x_i.reshape(n_pack, P)
    xj_p = x_j.reshape(n_pack, P)

    cost = pl.CostEstimate(
        flops=int(2 * n_pack * P * P + 2 * n_pack * P * max(pack, 8)
                  + 2 * n_pack * P),
        transcendentals=0,
        bytes_accessed=int(2 * n_pack * P * in_itemsize
                           + P * P * in_itemsize + N * out_itemsize),
    )

    out_t = pl.pallas_call(
        _bilinear_kernel,
        out_shape=jax.ShapeDtypeStruct((pack, n_pack), out_dtype),
        grid=(num_blocks,),
        in_specs=[
            pl.BlockSpec((tm, P), lambda i: (i, 0)),    # x_i row tile
            pl.BlockSpec((tm, P), lambda i: (i, 0)),    # x_j row tile
            _const_spec((P, P), w_single),              # weight (fetched once)
            _const_spec((pack, P), False),              # segment matrix (tiny)
        ],
        out_specs=pl.BlockSpec((pack, tm), lambda i: (0, i)),   # lane-dense
        compiler_params=pltpu.CompilerParams(
            dimension_semantics=("parallel",),
            vmem_limit_bytes=vmem_limit,
        ),
        cost_estimate=cost,
    )(xi_p, xj_p, w_eff, segt)

    # (pack, n_pack) -> (N,): packed row n, slot g  <->  original row n*pack+g.
    # The transpose touches only N elements (tiny vs. 2*N*H input elements).
    return out_t.T.reshape(N)


if __name__ == "__main__":
    key = jax.random.PRNGKey(0)
    k_w, k_i, k_j, k_i2, k_j2, k_i3, k_j3 = jax.random.split(key, 7)

    N, H = 8, 32  # N edge pairs, hidden_channels = 32

    # Deterministic init mimicking torch.nn.Linear default
    # (kaiming-uniform -> U(-1/sqrt(H), 1/sqrt(H)))
    bound = 1.0 / (H ** 0.5)
    weight = jax.random.uniform(k_w, (H, H), jnp.float32, -bound, bound)

    x_i = jax.random.normal(k_i, (N, H), jnp.float32)
    x_j = jax.random.normal(k_j, (N, H), jnp.float32)

    out = jax.block_until_ready(bilinear_predictor(x_i, x_j, weight))
    ref = jnp.sum((x_i @ weight.T) * x_j, axis=-1)
    assert out.shape == (N,)
    assert jnp.allclose(out, ref, atol=1e-4, rtol=1e-4), (out, ref)

    # Multi-step grid with a ragged last block (n_pack=500, tm=128 -> 4 steps,
    # last one partial) -- exercises the new no-pad boundary path.
    N2 = 2000
    x_i2 = jax.random.normal(k_i2, (N2, H), jnp.float32)
    x_j2 = jax.random.normal(k_j2, (N2, H), jnp.float32)
    out2 = jax.block_until_ready(bilinear_predictor(x_i2, x_j2, weight, tm=128))
    ref2 = jnp.sum((x_i2 @ weight.T) * x_j2, axis=-1)
    assert out2.shape == (N2,)
    assert jnp.allclose(out2, ref2, atol=1e-4, rtol=1e-4)

    # Odd N: pack degrades to 1 (copy-free fallback, lane-sparse P = H).
    N3 = 1001
    x_i3 = jax.random.normal(k_i3, (N3, H), jnp.float32)
    x_j3 = jax.random.normal(k_j3, (N3, H), jnp.float32)
    out3 = jax.block_until_ready(bilinear_predictor(x_i3, x_j3, weight))
    ref3 = jnp.sum((x_i3 @ weight.T) * x_j3, axis=-1)
    assert out3.shape == (N3,)
    assert jnp.allclose(out3, ref3, atol=1e-4, rtol=1e-4)

    print("KERNEL_OK")
</pallas_src>

<mosaic_0001>
module attributes {stable_mosaic.version = 11 : i64} {
  func.func @_bilinear_kernel(%arg0: i32, %arg1: memref<2x128xf32, #tpu.memory_space<vmem>>, %arg2: memref<2x128xf32, #tpu.memory_space<vmem>>, %arg3: memref<128x128xf32, #tpu.memory_space<vmem>>, %arg4: memref<4x128xf32, #tpu.memory_space<vmem>>, %arg5: memref<4x2xf32, #tpu.memory_space<vmem>>) attributes {dimension_semantics = [#tpu.dimension_semantics<parallel>], iteration_bounds = array<i64: 1>, scalar_prefetch = 0 : i64, scratch_operands = 0 : i64, tpu.core_type = #tpu.core_type<tc>, window_params = [{transform_indices = @transform_0, window_bounds = array<i64: 2, 128>}, {transform_indices = @transform_1, window_bounds = array<i64: 2, 128>}, {pipeline_mode = #tpu.pipeline_mode<synchronous>, transform_indices = @transform_2, window_bounds = array<i64: 128, 128>}, {pipeline_mode = #tpu.pipeline_mode<synchronous>, transform_indices = @transform_3, window_bounds = array<i64: 4, 128>}, {transform_indices = @transform_4, window_bounds = array<i64: 4, 2>}]} {
    %c0 = arith.constant 0 : index
    %c0_0 = arith.constant 0 : index
    %0 = vector.load %arg1[%c0, %c0_0] : memref<2x128xf32, #tpu.memory_space<vmem>>, vector<2x128xf32>
    %c0_1 = arith.constant 0 : index
    %c0_2 = arith.constant 0 : index
    %1 = vector.load %arg3[%c0_1, %c0_2] : memref<128x128xf32, #tpu.memory_space<vmem>>, vector<128x128xf32>
    %cst = arith.constant dense<0.000000e+00> : vector<2x128xf32>
    %2 = tpu.matmul %0, %1, %cst {dimension_numbers = #tpu.dot_dimension_numbers<[1], [1], [0], [0], [0, 0, 1, 0], [], []>} : vector<2x128xf32>, vector<128x128xf32>, vector<2x128xf32> -> vector<2x128xf32>
    %c0_3 = arith.constant 0 : index
    %c0_4 = arith.constant 0 : index
    %3 = vector.load %arg2[%c0_3, %c0_4] : memref<2x128xf32, #tpu.memory_space<vmem>>, vector<2x128xf32>
    %4 = arith.mulf %2, %3 : vector<2x128xf32>
    %c0_5 = arith.constant 0 : index
    %c0_6 = arith.constant 0 : index
    %5 = vector.load %arg4[%c0_5, %c0_6] : memref<4x128xf32, #tpu.memory_space<vmem>>, vector<4x128xf32>
    %cst_7 = arith.constant dense<0.000000e+00> : vector<4x2xf32>
    %6 = tpu.matmul %5, %4, %cst_7 {dimension_numbers = #tpu.dot_dimension_numbers<[1], [1], [0], [0], [0, 0, 1, 0], [], []>} : vector<4x128xf32>, vector<2x128xf32>, vector<4x2xf32> -> vector<4x2xf32>
    %c0_8 = arith.constant 0 : index
    %c0_9 = arith.constant 0 : index
    %7 = vector.load %arg5[%c0_8, %c0_9] : memref<4x2xf32, #tpu.memory_space<vmem>>, vector<4x2xf32>
    tpu.vector_store %arg5[%c0_8, %c0_9], %6 {strides = array<i32>} : memref<4x2xf32, #tpu.memory_space<vmem>>, vector<4x2xf32>,
    return
  }
  func.func @transform_0(%arg0: i32) -> (i32, i32) {
    %c0_i32 = arith.constant 0 : i32
    %c0_i32_0 = arith.constant 0 : i32
    return %arg0, %c0_i32 : i32, i32
  }
  func.func @transform_1(%arg0: i32) -> (i32, i32) {
    %c0_i32 = arith.constant 0 : i32
    %c0_i32_0 = arith.constant 0 : i32
    return %arg0, %c0_i32 : i32, i32
  }
  func.func @transform_2(%arg0: i32) -> (i32, i32) {
    %c0_i32 = arith.constant 0 : i32
    %c0_i32_0 = arith.constant 0 : i32
    %c0_i32_1 = arith.constant 0 : i32
    return %c0_i32, %c0_i32_0 : i32, i32
  }
  func.func @transform_3(%arg0: i32) -> (i32, i32) {
    %c0_i32 = arith.constant 0 : i32
    %c0_i32_0 = arith.constant 0 : i32
    %c0_i32_1 = arith.constant 0 : i32
    return %c0_i32, %c0_i32_0 : i32, i32
  }
  func.func @transform_4(%arg0: i32) -> (i32, i32) {
    %c0_i32 = arith.constant 0 : i32
    %c0_i32_0 = arith.constant 0 : i32
    return %c0_i32, %arg0 : i32, i32
  }
}

</mosaic_0001>

<llo_original>
// kernel: tpu_custom_call.1
$region0: #{tpu_custom_call.1}
  #allocation0 [shape = 'u32[]', space=smem, size = 0x4, offset = 0x4, fixed_abs, tag = 'smem constant byte address 0x4 - core index']
  #allocation1 [shape = 'u32[72,128]{1,0:T(1,128)}', space=vmem, size = 0x9000, scoped, tag = 'internal scratch']
  %s0 = inlined_call_operand.hbm [shape: f32[2,128], index: 0, kind: input, shape index: {}]
  %s1 = inlined_call_operand.hbm [shape: f32[2,128], index: 1, kind: input, shape index: {}]
  %s2 = inlined_call_operand.hbm [shape: f32[128,128], index: 2, kind: input, shape index: {}]
  %s3 = inlined_call_operand.hbm [shape: f32[4,128], index: 3, kind: input, shape index: {}]
  %s4 = inlined_call_operand.vmem [shape: f32[4,2], index: 4, kind: output, shape index: {}]
  %s5 = sld [smem:[#allocation0]]
  $region42: #{tpu_custom_call.1} parent=0
    _
  %s7 = ssub.s32 1, %s5
  %s8 = scalar_select 0, %s7, %s5
  $region1: #{tpu_custom_call.1} parent=0
    #allocation2 [shape = 'u8[1024]{0}', space=vmem, size = 0x400, scoped, tag = 'input window, operand 0, single buffered']
    #allocation3 [shape = 's32[1]{0}', space=sflag, size = 0x4, scoped, tag = 'scoped memory for tpu_custom_call.1']
    #allocation4 [shape = 'u8[1024]{0}', space=vmem, size = 0x400, scoped, tag = 'input window, operand 1, single buffered']
    #allocation5 [shape = 's32[1]{0}', space=sflag, size = 0x4, scoped, tag = 'scoped memory for tpu_custom_call.1']
    #allocation6 [shape = 'u8[65536]{0}', space=vmem, size = 0x10000, scoped, tag = 'input window, operand 2, single buffered']
    #allocation7 [shape = 'u8[2048]{0}', space=vmem, size = 0x800, scoped, tag = 'input window, operand 3, single buffered']
    #allocation8 [shape = 's32[1]{0}', space=sflag, size = 0x4, scoped, tag = 'scoped memory for tpu_custom_call.1']
    %9 = vsyncpa [#allocation3], 0
    %10 = vsyncpa [#allocation5], 0
    %11 = vsyncpa [#allocation8], 0
    // Predicated region
    $region2: #{tpu_custom_call.1} parent=1 // pred_check
      _
    $region3: #{tpu_custom_call.1} parent=1 // pred_check_branch
      %13 = sbr.rel (0) target = $region5
    $region4: #{tpu_custom_call.1} parent=1 // pred_region
      %15 = vsyncadd [#allocation3], 0
      %s17 = sshll.u32 %s0, 4
      %s18 = int_to_ptr.hbm [resolvable:$true] %s17
      %s19 = sshll.u32 [#allocation2], 4
      %s20 = int_to_ptr.vmem [resolvable:$true] %s19
      %22 = dma.hbm_to_vmem [thread:$0]  %s18, 32, %s20, [#allocation3]
    $region5: #{tpu_custom_call.1} parent=1 // pred_fallthru
      _
    // Predicated region
    $region6: #{tpu_custom_call.1} parent=1 // pred_check
      _
    $region7: #{tpu_custom_call.1} parent=1 // pred_check_branch
      %24 = sbr.rel (0) target = $region9
    $region8: #{tpu_custom_call.1} parent=1 // pred_region
      %26 = vsyncadd [#allocation5], 0
      %s28 = sshll.u32 %s1, 4
      %s29 = int_to_ptr.hbm [resolvable:$true] %s28
      %s30 = sshll.u32 [#allocation4], 4
      %s31 = int_to_ptr.vmem [resolvable:$true] %s30
      %33 = dma.hbm_to_vmem [thread:$0]  %s29, 32, %s31, [#allocation5]
    $region9: #{tpu_custom_call.1} parent=1 // pred_fallthru
      _
    // Predicated region
    $region10: #{tpu_custom_call.1} parent=1 // pred_check
      _
    $region11: #{tpu_custom_call.1} parent=1 // pred_check_branch
      %35 = sbr.rel (0) target = $region13
    $region12: #{tpu_custom_call.1} parent=1 // pred_region
      %37 = vsyncadd [#allocation5], 0
      %s38 = sshll.u32 %s2, 4
      %s39 = int_to_ptr.hbm [resolvable:$true] %s38
      %s40 = sshll.u32 [#allocation6], 4
      %s41 = int_to_ptr.vmem [resolvable:$true] %s40
      %46 = dma.hbm_to_vmem [thread:$0]  %s39, 2048, %s41, [#allocation5], 128, 128, 8
    $region13: #{tpu_custom_call.1} parent=1 // pred_fallthru
      _
    // Predicated region
    $region14: #{tpu_custom_call.1} parent=1 // pred_check
      _
    $region15: #{tpu_custom_call.1} parent=1 // pred_check_branch
      %48 = sbr.rel (0) target = $region17
    $region16: #{tpu_custom_call.1} parent=1 // pred_region
      %50 = vsyncadd [#allocation8], 0
      %s52 = sshll.u32 %s3, 4
      %s53 = int_to_ptr.hbm [resolvable:$true] %s52
      %s54 = sshll.u32 [#allocation7], 4
      %s55 = int_to_ptr.vmem [resolvable:$true] %s54
      %57 = dma.hbm_to_vmem [thread:$0]  %s53, 64, %s55, [#allocation8]
    $region17: #{tpu_custom_call.1} parent=1 // pred_fallthru
      _
    // Predicated region
    $region18: #{tpu_custom_call.1} parent=1 // pred_check
      _
    $region19: #{tpu_custom_call.1} parent=1 // pred_check_branch
      %59 = sbr.rel (0) target = $region21
    $region20: #{tpu_custom_call.1} parent=1 // pred_region
      %61 = dma.done [#allocation3], 32
    $region21: #{tpu_custom_call.1} parent=1 // pred_fallthru
      _
    // Predicated region
    $region22: #{tpu_custom_call.1} parent=1 // pred_check
      _
    $region23: #{tpu_custom_call.1} parent=1 // pred_check_branch
      %63 = sbr.rel (0) target = $region25
    $region24: #{tpu_custom_call.1} parent=1 // pred_region
      %65 = dma.done [#allocation5], 32
    $region25: #{tpu_custom_call.1} parent=1 // pred_fallthru
      _
    // Predicated region
    $region26: #{tpu_custom_call.1} parent=1 // pred_check
      _
    $region27: #{tpu_custom_call.1} parent=1 // pred_check_branch
      %67 = sbr.rel (0) target = $region29
    $region28: #{tpu_custom_call.1} parent=1 // pred_region
      %69 = dma.done [#allocation5], 2048
    $region29: #{tpu_custom_call.1} parent=1 // pred_fallthru
      _
    // Predicated region
    $region30: #{tpu_custom_call.1} parent=1 // pred_check
      _
    $region31: #{tpu_custom_call.1} parent=1 // pred_check_branch
      %71 = sbr.rel (0) target = $region33
    $region32: #{tpu_custom_call.1} parent=1 // pred_region
      %73 = dma.done [#allocation8], 64
    $region33: #{tpu_custom_call.1} parent=1 // pred_fallthru
      _
    %v74 = vld [vmem:[#allocation2] sm:$0x3]
    %v75 = vld [vmem:[#allocation6] sm:$0xff]
    %v76 = vld [vmem:[#allocation6 + $0x8] sm:$0xff]
    %v77 = vld [vmem:[#allocation6 + $0x10] sm:$0xff]
    %v78 = vld [vmem:[#allocation6 + $0x18] sm:$0xff]
    %v79 = vld [vmem:[#allocation6 + $0x20] sm:$0xff]
    %v80 = vld [vmem:[#allocation6 + $0x28] sm:$0xff]
    %v81 = vld [vmem:[#allocation6 + $0x30] sm:$0xff]
    %v82 = vld [vmem:[#allocation6 + $0x38] sm:$0xff]
    %v83 = vld [vmem:[#allocation6 + $0x40] sm:$0xff]
    %v84 = vld [vmem:[#allocation6 + $0x48] sm:$0xff]
    %v85 = vld [vmem:[#allocation6 + $0x50] sm:$0xff]
    %v86 = vld [vmem:[#allocation6 + $0x58] sm:$0xff]
    %v87 = vld [vmem:[#allocation6 + $0x60] sm:$0xff]
    %v88 = vld [vmem:[#allocation6 + $0x68] sm:$0xff]
    %v89 = vld [vmem:[#allocation6 + $0x70] sm:$0xff]
    %v90 = vld [vmem:[#allocation6 + $0x78] sm:$0xff]
    %91 = vmatpush.xpose.msra.mxu0 %v90
    %92 = vmatpush.xpose.msra.mxu0 %v89
    %93 = vmatpush.xpose.msra.mxu0 %v88
    %94 = vmatpush.xpose.msra.mxu0 %v87
    %95 = vmatpush.xpose.msra.mxu0 %v86
    %96 = vmatpush.xpose.msra.mxu0 %v85
    %97 = vmatpush.xpose.msra.mxu0 %v84
    %98 = vmatpush.xpose.msra.mxu0 %v83
    %99 = vmatpush.xpose.msra.mxu0 %v82
    %100 = vmatpush.xpose.msra.mxu0 %v81
    %101 = vmatpush.xpose.msra.mxu0 %v80
    %102 = vmatpush.xpose.msra.mxu0 %v79
    %103 = vmatpush.xpose.msra.mxu0 %v78
    %104 = vmatpush.xpose.msra.mxu0 %v77
    %105 = vmatpush.xpose.msra.mxu0 %v76
    %106 = vmatpush.xpose.msra.mxu0 %v75
    %107 = vmatmul.f32.gmra.mxu0 %v74
    %v108 = vpop.f32.mrf.mxu0
    %v109 = vadd.f32 0.0, %v108
    %110 = vdwg.mxu0
    %v111 = vld [vmem:[#allocation4] sm:$0x3]
    %v112 = vmul.f32 %v109, %v111
    %v113 = vld [vmem:[#allocation7] sm:$0xf]
    %114 = vmatpush.xpose.msra.mxu0 0.0
    %115 = vmatpush.xpose.msra.mxu0 0.0
    %116 = vmatpush.xpose.msra.mxu0 0.0
    %117 = vmatpush.xpose.msra.mxu0 0.0
    %118 = vmatpush.xpose.msra.mxu0 0.0
    %119 = vmatpush.xpose.msra.mxu0 0.0
    %120 = vmatpush.xpose.msra.mxu0 0.0
    %121 = vmatpush.xpose.msra.mxu0 0.0
    %122 = vmatpush.xpose.msra.mxu0 0.0
    %123 = vmatpush.xpose.msra.mxu0 0.0
    %124 = vmatpush.xpose.msra.mxu0 0.0
    %125 = vmatpush.xpose.msra.mxu0 0.0
    %126 = vmatpush.xpose.msra.mxu0 0.0
    %127 = vmatpush.xpose.msra.mxu0 0.0
    %128 = vmatpush.xpose.msra.mxu0 0.0
    %129 = vmatpush.xpose.msra.mxu0 %v112
    %130 = vmatmul.f32.gmra.mxu0 %v113
    %v131 = vpop.f32.mrf.mxu0
    %v132 = vadd.f32 0.0, %v131
    %133 = vdwg.mxu0
    %vm134 = vcmask 11264
    %135 = vst.msk [vmem:[%s4] sm:$0xf] %vm134, %v132
    // Predicated region
    $region34: #{tpu_custom_call.1} parent=1 // pred_check
      _
    $region35: #{tpu_custom_call.1} parent=1 // pred_check_branch
      %137 = sbr.rel (0) target = $region37
    $region36: #{tpu_custom_call.1} parent=1 // pred_region
      _
    $region37: #{tpu_custom_call.1} parent=1 // pred_fallthru
      _
    // Predicated region
    $region38: #{tpu_custom_call.1} parent=1 // pred_check
      _
    $region39: #{tpu_custom_call.1} parent=1 // pred_check_branch
      %139 = sbr.rel (0) target = $region41
    $region40: #{tpu_custom_call.1} parent=1 // pred_region
      _
    $region41: #{tpu_custom_call.1} parent=1 // pred_fallthru
      _
    %140 = vsyncpa [#allocation3], 1
    %141 = vsyncpa [#allocation5], 1
    %142 = vsyncpa [#allocation8], 1

</llo_original>
